<compile_context>
chip_gen: v6e
topology: v6e:2x2x1
jax: 0.10.0
libtpu: 0.0.40
codegen_flags: <defaults>
</compile_context>

<pallas_src>
import functools
import math

import jax
import jax.numpy as jnp
from jax.experimental import pallas as pl
from jax.experimental.pallas import tpu as pltpu


def _block_kernel(p_ref, w_ref, b_ref, gamma_ref, beta_ref, gmat_ref, o_ref,
                  *, inv_count: float, eps: float):
    """Conv(as GEMM) + bias + GroupNorm + SiLU for one batch element.

    p_ref    : (1, K, N)      im2col patches, K = 9*Cin, N = H*W
    w_ref    : (Cout, K)      conv weight, reordered to match patch layout
    b_ref    : (Cout, 1)      conv bias
    gamma_ref: (Cout, 1)      GroupNorm weight
    beta_ref : (Cout, 1)      GroupNorm bias
    gmat_ref : (Cout, Cout)   group-membership matrix (1 if same group)
    o_ref    : (1, Cout, N)   output
    """
    patches = p_ref[0]                                                  # (K, N)

    # --- conv as a single wide MXU matmul + bias ---
    y = jnp.dot(w_ref[...], patches, preferred_element_type=jnp.float32)  # (Cout, N)
    y = y + b_ref[...]                                                  # (Cout,1) broadcast

    # --- GroupNorm (biased variance, eps=1e-5), stats via membership matmul ---
    mean = jnp.sum(
        jnp.dot(gmat_ref[...], y, preferred_element_type=jnp.float32),
        axis=1, keepdims=True) * inv_count                              # (Cout, 1)
    d = y - mean
    var = jnp.sum(
        jnp.dot(gmat_ref[...], d * d, preferred_element_type=jnp.float32),
        axis=1, keepdims=True) * inv_count                              # (Cout, 1)
    yn = d * jax.lax.rsqrt(var + eps)
    yn = yn * gamma_ref[...] + beta_ref[...]

    # TODO(synk): optional scale_shift branch (x*(scale+1)+shift) not fused here;
    # the default forward(scale_shift=None) path is what this kernel implements.

    # --- SiLU: x * sigmoid(x) ---
    o_ref[0] = yn * (1.0 / (1.0 + jnp.exp(-yn)))


def block_forward(x, w, b, gamma, beta, *, groups):
    """x: (B, Cin, H, W) f32, w: (Cout, Cin, 3, 3), b/gamma/beta: (Cout,) -> (B, Cout, H, W)."""
    B, Cin, H, W = x.shape
    Cout = w.shape[0]
    N = H * W
    K = 9 * Cin
    Cg = Cout // groups

    # --- wrapper-side layout plumbing (im2col + weight reorder) ---
    xpad = jnp.pad(x, ((0, 0), (0, 0), (1, 1), (1, 1)))
    taps = [xpad[:, :, dh:dh + H, dw:dw + W] for dh in range(3) for dw in range(3)]
    patches = jnp.stack(taps, axis=1).reshape(B, K, N)                  # (B, 9*Cin, N)
    w2 = jnp.transpose(w, (0, 2, 3, 1)).reshape(Cout, K)                # (Cout, 9*Cin)

    # group-membership matrix: gmat[c1,c2] = 1 iff c1, c2 in the same GroupNorm group
    cidx = jnp.arange(Cout) // Cg
    gmat = (cidx[:, None] == cidx[None, :]).astype(jnp.float32)         # (Cout, Cout)

    b2 = b.reshape(Cout, 1).astype(jnp.float32)
    g2 = gamma.reshape(Cout, 1).astype(jnp.float32)
    be2 = beta.reshape(Cout, 1).astype(jnp.float32)

    kernel = functools.partial(_block_kernel,
                               inv_count=1.0 / (Cg * N), eps=1e-5)

    out = pl.pallas_call(
        kernel,
        out_shape=jax.ShapeDtypeStruct((B, Cout, N), jnp.float32),
        grid=(B,),
        in_specs=[
            pl.BlockSpec((1, K, N), lambda i: (i, 0, 0)),     # patches (per batch)
            pl.BlockSpec((Cout, K), lambda i: (0, 0)),        # conv weight
            pl.BlockSpec((Cout, 1), lambda i: (0, 0)),        # conv bias
            pl.BlockSpec((Cout, 1), lambda i: (0, 0)),        # GN gamma
            pl.BlockSpec((Cout, 1), lambda i: (0, 0)),        # GN beta
            pl.BlockSpec((Cout, Cout), lambda i: (0, 0)),     # group membership
        ],
        out_specs=pl.BlockSpec((1, Cout, N), lambda i: (i, 0, 0)),
        compiler_params=pltpu.CompilerParams(
            dimension_semantics=("parallel",)),
        cost_estimate=pl.CostEstimate(
            flops=2 * B * Cout * K * N + 4 * B * Cout * Cout * N,
            transcendentals=B * Cout * N,
            bytes_accessed=4 * (B * K * N + B * Cout * N + Cout * K + Cout * Cout)),
    )(patches, w2, b2, g2, be2, gmat)

    return out.reshape(B, Cout, H, W)


def block_reference(x, w, b, gamma, beta, *, groups):
    """Pure-JAX reference mirroring the PyTorch Block.forward (scale_shift=None)."""
    y = jax.lax.conv_general_dilated(
        x, w, window_strides=(1, 1), padding=((1, 1), (1, 1)),
        dimension_numbers=('NCHW', 'OIHW', 'NCHW'),
        precision=jax.lax.Precision.HIGHEST)
    y = y + b.reshape(1, -1, 1, 1)
    B, C, H, W = y.shape
    Cg = C // groups
    yg = y.reshape(B, groups, Cg, H, W)
    mean = jnp.mean(yg, axis=(2, 3, 4), keepdims=True)
    var = jnp.mean((yg - mean) ** 2, axis=(2, 3, 4), keepdims=True)
    yn = (yg - mean) * jax.lax.rsqrt(var + 1e-5)
    yn = yn.reshape(B, C, H, W) * gamma.reshape(1, -1, 1, 1) + beta.reshape(1, -1, 1, 1)
    return yn * jax.nn.sigmoid(yn)


if __name__ == "__main__":
    # Small shapes consistent with the module: Block(in_channel=4, out_channel=8, groups=4)
    B, Cin, Cout, groups, H, W = 2, 4, 8, 4, 16, 16

    key = jax.random.PRNGKey(0)
    kx, kw, kb, kg, kbe = jax.random.split(key, 5)

    x = jax.random.normal(kx, (B, Cin, H, W), dtype=jnp.float32)
    w = jax.random.normal(kw, (Cout, Cin, 3, 3), dtype=jnp.float32) * (1.0 / math.sqrt(9 * Cin))
    b = jax.random.normal(kb, (Cout,), dtype=jnp.float32) * 0.1
    gamma = 1.0 + 0.1 * jax.random.normal(kg, (Cout,), dtype=jnp.float32)
    beta = 0.1 * jax.random.normal(kbe, (Cout,), dtype=jnp.float32)

    y = block_forward(x, w, b, gamma, beta, groups=groups)
    y = jax.block_until_ready(y)

    y_ref = block_reference(x, w, b, gamma, beta, groups=groups)
    assert y.shape == (B, Cout, H, W)
    assert jnp.allclose(y, y_ref, atol=1e-3, rtol=1e-3), "mismatch vs reference"

    print("KERNEL_OK")
</pallas_src>

<mosaic_0001>
module attributes {stable_mosaic.version = 11 : i64} {
  func.func @_block_kernel(%arg0: i32, %arg1: memref<1x36x256xf32, #tpu.memory_space<vmem>>, %arg2: memref<8x36xf32, #tpu.memory_space<vmem>>, %arg3: memref<8x1xf32, #tpu.memory_space<vmem>>, %arg4: memref<8x1xf32, #tpu.memory_space<vmem>>, %arg5: memref<8x1xf32, #tpu.memory_space<vmem>>, %arg6: memref<8x8xf32, #tpu.memory_space<vmem>>, %arg7: memref<1x8x256xf32, #tpu.memory_space<vmem>>) attributes {dimension_semantics = [#tpu.dimension_semantics<parallel>], iteration_bounds = array<i64: 2>, scalar_prefetch = 0 : i64, scratch_operands = 0 : i64, tpu.core_type = #tpu.core_type<tc>, window_params = [{transform_indices = @transform_0, window_bounds = array<i64: 1, 36, 256>}, {pipeline_mode = #tpu.pipeline_mode<synchronous>, transform_indices = @transform_1, window_bounds = array<i64: 8, 36>}, {pipeline_mode = #tpu.pipeline_mode<synchronous>, transform_indices = @transform_2, window_bounds = array<i64: 8, 1>}, {pipeline_mode = #tpu.pipeline_mode<synchronous>, transform_indices = @transform_3, window_bounds = array<i64: 8, 1>}, {pipeline_mode = #tpu.pipeline_mode<synchronous>, transform_indices = @transform_4, window_bounds = array<i64: 8, 1>}, {pipeline_mode = #tpu.pipeline_mode<synchronous>, transform_indices = @transform_5, window_bounds = array<i64: 8, 8>}, {transform_indices = @transform_6, window_bounds = array<i64: 1, 8, 256>}]} {
    %c0 = arith.constant 0 : index
    %c0_0 = arith.constant 0 : index
    %c0_1 = arith.constant 0 : index
    %0 = vector.load %arg1[%c0, %c0_0, %c0_1] : memref<1x36x256xf32, #tpu.memory_space<vmem>>, vector<1x36x256xf32>
    %1 = vector.shape_cast %0 : vector<1x36x256xf32> to vector<36x256xf32>
    %c0_2 = arith.constant 0 : index
    %c0_3 = arith.constant 0 : index
    %2 = vector.load %arg2[%c0_2, %c0_3] : memref<8x36xf32, #tpu.memory_space<vmem>>, vector<8x36xf32>
    %cst = arith.constant dense<0.000000e+00> : vector<8x256xf32>
    %3 = tpu.matmul %2, %1, %cst {dimension_numbers = #tpu.dot_dimension_numbers<[1], [0], [0], [1], [0, 0, 1, 1], [], []>} : vector<8x36xf32>, vector<36x256xf32>, vector<8x256xf32> -> vector<8x256xf32>
    %c0_4 = arith.constant 0 : index
    %c0_5 = arith.constant 0 : index
    %4 = vector.load %arg3[%c0_4, %c0_5] : memref<8x1xf32, #tpu.memory_space<vmem>>, vector<8x1xf32>
    %5 = vector.broadcast %4 : vector<8x1xf32> to vector<8x256xf32>
    %6 = arith.addf %3, %5 : vector<8x256xf32>
    %c0_6 = arith.constant 0 : index
    %c0_7 = arith.constant 0 : index
    %7 = vector.load %arg6[%c0_6, %c0_7] : memref<8x8xf32, #tpu.memory_space<vmem>>, vector<8x8xf32>
    %cst_8 = arith.constant dense<0.000000e+00> : vector<8x256xf32>
    %8 = tpu.matmul %7, %6, %cst_8 {dimension_numbers = #tpu.dot_dimension_numbers<[1], [0], [0], [1], [0, 0, 1, 1], [], []>} : vector<8x8xf32>, vector<8x256xf32>, vector<8x256xf32> -> vector<8x256xf32>
    %cst_9 = arith.constant dense<0.000000e+00> : vector<8xf32>
    %9 = vector.multi_reduction <add>, %8, %cst_9 [1] : vector<8x256xf32> to vector<8xf32>
    %10 = vector.shape_cast %9 : vector<8xf32> to vector<8x1xf32>
    %cst_10 = arith.constant 0.001953125 : f32
    %11 = vector.broadcast %cst_10 : f32 to vector<8x1xf32>
    %12 = arith.mulf %10, %11 : vector<8x1xf32>
    %13 = vector.broadcast %12 : vector<8x1xf32> to vector<8x256xf32>
    %14 = arith.subf %6, %13 : vector<8x256xf32>
    %c0_11 = arith.constant 0 : index
    %c0_12 = arith.constant 0 : index
    %15 = vector.load %arg6[%c0_11, %c0_12] : memref<8x8xf32, #tpu.memory_space<vmem>>, vector<8x8xf32>
    %16 = arith.mulf %14, %14 : vector<8x256xf32>
    %cst_13 = arith.constant dense<0.000000e+00> : vector<8x256xf32>
    %17 = tpu.matmul %15, %16, %cst_13 {dimension_numbers = #tpu.dot_dimension_numbers<[1], [0], [0], [1], [0, 0, 1, 1], [], []>} : vector<8x8xf32>, vector<8x256xf32>, vector<8x256xf32> -> vector<8x256xf32>
    %cst_14 = arith.constant dense<0.000000e+00> : vector<8xf32>
    %18 = vector.multi_reduction <add>, %17, %cst_14 [1] : vector<8x256xf32> to vector<8xf32>
    %19 = vector.shape_cast %18 : vector<8xf32> to vector<8x1xf32>
    %cst_15 = arith.constant 0.001953125 : f32
    %20 = vector.broadcast %cst_15 : f32 to vector<8x1xf32>
    %21 = arith.mulf %19, %20 : vector<8x1xf32>
    %cst_16 = arith.constant 9.99999974E-6 : f32
    %22 = vector.broadcast %cst_16 : f32 to vector<8x1xf32>
    %23 = arith.addf %21, %22 : vector<8x1xf32>
    %24 = math.rsqrt %23 : vector<8x1xf32>
    %25 = vector.broadcast %24 : vector<8x1xf32> to vector<8x256xf32>
    %26 = arith.mulf %14, %25 : vector<8x256xf32>
    %c0_17 = arith.constant 0 : index
    %c0_18 = arith.constant 0 : index
    %27 = vector.load %arg4[%c0_17, %c0_18] : memref<8x1xf32, #tpu.memory_space<vmem>>, vector<8x1xf32>
    %28 = vector.broadcast %27 : vector<8x1xf32> to vector<8x256xf32>
    %29 = arith.mulf %26, %28 : vector<8x256xf32>
    %c0_19 = arith.constant 0 : index
    %c0_20 = arith.constant 0 : index
    %30 = vector.load %arg5[%c0_19, %c0_20] : memref<8x1xf32, #tpu.memory_space<vmem>>, vector<8x1xf32>
    %31 = vector.broadcast %30 : vector<8x1xf32> to vector<8x256xf32>
    %32 = arith.addf %29, %31 : vector<8x256xf32>
    %cst_21 = arith.constant 0.000000e+00 : f32
    %33 = vector.broadcast %cst_21 : f32 to vector<8x256xf32>
    %34 = arith.subf %33, %32 : vector<8x256xf32>
    %35 = math.exp %34 : vector<8x256xf32>
    %cst_22 = arith.constant 1.000000e+00 : f32
    %36 = vector.broadcast %cst_22 : f32 to vector<8x256xf32>
    %37 = arith.addf %36, %35 : vector<8x256xf32>
    %cst_23 = arith.constant 1.000000e+00 : f32
    %38 = vector.broadcast %cst_23 : f32 to vector<8x256xf32>
    %39 = arith.divf %38, %37 : vector<8x256xf32>
    %40 = arith.mulf %32, %39 : vector<8x256xf32>
    %c0_24 = arith.constant 0 : index
    %c0_25 = arith.constant 0 : index
    %c0_26 = arith.constant 0 : index
    %41 = vector.load %arg7[%c0_24, %c0_25, %c0_26] : memref<1x8x256xf32, #tpu.memory_space<vmem>>, vector<1x8x256xf32>
    %42 = vector.shape_cast %41 : vector<1x8x256xf32> to vector<8x256xf32>
    %43 = vector.shape_cast %40 : vector<8x256xf32> to vector<1x8x256xf32>
    tpu.vector_store %arg7[%c0_24, %c0_25, %c0_26], %43 {strides = array<i32>} : memref<1x8x256xf32, #tpu.memory_space<vmem>>, vector<1x8x256xf32>,
    return
  }
  func.func @transform_0(%arg0: i32) -> (i32, i32, i32) {
    %c0_i32 = arith.constant 0 : i32
    %c0_i32_0 = arith.constant 0 : i32
    %c0_i32_1 = arith.constant 0 : i32
    return %arg0, %c0_i32, %c0_i32_0 : i32, i32, i32
  }
  func.func @transform_1(%arg0: i32) -> (i32, i32) {
    %c0_i32 = arith.constant 0 : i32
    %c0_i32_0 = arith.constant 0 : i32
    %c0_i32_1 = arith.constant 0 : i32
    return %c0_i32, %c0_i32_0 : i32, i32
  }
  func.func @transform_2(%arg0: i32) -> (i32, i32) {
    %c0_i32 = arith.constant 0 : i32
    %c0_i32_0 = arith.constant 0 : i32
    %c0_i32_1 = arith.constant 0 : i32
    return %c0_i32, %c0_i32_0 : i32, i32
  }
  func.func @transform_3(%arg0: i32) -> (i32, i32) {
    %c0_i32 = arith.constant 0 : i32
    %c0_i32_0 = arith.constant 0 : i32
    %c0_i32_1 = arith.constant 0 : i32
    return %c0_i32, %c0_i32_0 : i32, i32
  }
  func.func @transform_4(%arg0: i32) -> (i32, i32) {
    %c0_i32 = arith.constant 0 : i32
    %c0_i32_0 = arith.constant 0 : i32
    %c0_i32_1 = arith.constant 0 : i32
    return %c0_i32, %c0_i32_0 : i32, i32
  }
  func.func @transform_5(%arg0: i32) -> (i32, i32) {
    %c0_i32 = arith.constant 0 : i32
    %c0_i32_0 = arith.constant 0 : i32
    %c0_i32_1 = arith.constant 0 : i32
    return %c0_i32, %c0_i32_0 : i32, i32
  }
  func.func @transform_6(%arg0: i32) -> (i32, i32, i32) {
    %c0_i32 = arith.constant 0 : i32
    %c0_i32_0 = arith.constant 0 : i32
    %c0_i32_1 = arith.constant 0 : i32
    return %arg0, %c0_i32, %c0_i32_0 : i32, i32, i32
  }
}

</mosaic_0001>

<llo_original>
// kernel: tpu_custom_call.1
$region0: #{tpu_custom_call.1}
  #allocation0 [shape = 'u32[]', space=smem, size = 0x4, offset = 0x4, fixed_abs, tag = 'smem constant byte address 0x4 - core index']
  #allocation1 [shape = 'u32[144,128]{1,0:T(1,128)}', space=vmem, size = 0x12000, scoped, tag = 'internal scratch']
  %s0 = inlined_call_operand.vmem [shape: f32[2,36,256], index: 0, kind: input, shape index: {}]
  %s1 = inlined_call_operand.vmem [shape: f32[8,36], index: 1, kind: input, shape index: {}]
  %s2 = inlined_call_operand.vmem [shape: f32[8,1], index: 2, kind: input, shape index: {}]
  %s3 = inlined_call_operand.vmem [shape: f32[8,1], index: 3, kind: input, shape index: {}]
  %s4 = inlined_call_operand.vmem [shape: f32[8,1], index: 4, kind: input, shape index: {}]
  %s5 = inlined_call_operand.vmem [shape: f32[8,8], index: 5, kind: input, shape index: {}]
  %s6 = inlined_call_operand.hbm [shape: f32[2,8,256], index: 6, kind: output, shape index: {}]
  %s7 = sld [smem:[#allocation0]]
  $region57: #{tpu_custom_call.1} parent=0
    _
  %s9 = ssub.s32 1, %s7
  %s10 = scalar_select 0, %s9, %s7
  $region1: #{tpu_custom_call.1} parent=0
    #allocation2 [shape = 'u8[16384]{0}', space=vmem, size = 0x4000, scoped, tag = 'output window, operand 0']
    #allocation3 [shape = 's32[2]{0}', space=sflag, size = 0x8, scoped, tag = 'scoped memory for tpu_custom_call.1']
    %11 = vsyncpa [#allocation3], 0
    %s12 = scalar_lea.sflag [#allocation3], 1
    %13 = vsyncpa %s12, 0
    loop: start=0, step=1, limit=4
    $region2: #{tpu_custom_call.1} parent=1 // loop_pre_header
      _
    $region3: #{tpu_custom_call.1} parent=1 // loop_header
      %s15 = sphi 0, %s19
      %p16 = scmp.ge.s32.totalorder %s15, 4
      %s25 = sphi 0, %s27
      %s28 = sphi 0, %s25
      %s29 = sphi 0, %s28
      %s45 = sphi 0, %s29
      %s49 = sphi 0, %s49
      %s51 = sphi 0, %s49
      %s52 = sphi 0, %s51
      %s66 = sphi 0, %s52
      %s70 = sphi 0, %s70
      %s72 = sphi 0, %s70
      %s73 = sphi 0, %s72
      %s87 = sphi 0, %s73
      %s91 = sphi 0, %s91
      %s93 = sphi 0, %s91
      %s94 = sphi 0, %s93
      %s108 = sphi 0, %s94
      %s112 = sphi 0, %s112
      %s114 = sphi 0, %s112
      %s115 = sphi 0, %s114
      %s129 = sphi 0, %s115
      %s133 = sphi 0, %s133
      %s135 = sphi 0, %s133
      %s136 = sphi 0, %s135
      %s150 = sphi 0, %s136
      %s156 = sphi 0, %s158
      %s159 = sphi 0, %s156
      %s160 = sphi 0, %s159
      %s176 = sphi 0, %s160
    $region4: #{tpu_custom_call.1} parent=1 // loop_header_branch
      %18 = sbr.rel (%p16) target = $region8
    $region5: #{tpu_custom_call.1} parent=1 // loop_body
      %s20 = ssub.s32 %s15, 1
      %s21 = ssub.s32 %s15, 2
      %s22 = sadd.s32 %s15, 1
      %s23 = ssub.s32 %s15, %s22
      %p24 = scmp.eq.s32.totalorder %s23, 0
      %s26 = sadd.s32 %s25, 1
      %s27 = scalar_select %p24, %s25, %s26
      %p30 = pneg %p24
      %p31 = scmp.eq.s32.totalorder %s15, 1
      %p32 = por %p30, %p31
      %p33 = scmp.ne.s32.totalorder %s25, %s28
      %p34 = scmp.eq.s32.totalorder %s15, 0
      %p35 = por %p33, %p34
      %p36 = scmp.ne.s32.totalorder %s25, %s28
      %p37 = scmp.eq.s32.totalorder %s20, 1
      %p38 = por %p36, %p37
      %p39 = scmp.ne.s32.totalorder %s28, %s29
      %p40 = scmp.eq.s32.totalorder %s20, 0
      %p41 = por %p39, %p40
      %p42 = scmp.ne.s32.totalorder %s28, %s29
      %p43 = scmp.eq.s32.totalorder %s21, 1
      %p44 = por %p42, %p43
      %p46 = scmp.ne.s32.totalorder %s29, %s45
      %p47 = scmp.eq.s32.totalorder %s21, 0
      %p48 = por %p46, %p47
      %s50 = sadd.s32 %s49, 1
      %p53 = scmp.eq.s32.totalorder %s15, 1
      %p54 = scmp.ne.s32.totalorder %s49, %s51
      %p55 = scmp.eq.s32.totalorder %s15, 0
      %p56 = por %p54, %p55
      %p57 = scmp.ne.s32.totalorder %s49, %s51
      %p58 = scmp.eq.s32.totalorder %s20, 1
      %p59 = por %p57, %p58
      %p60 = scmp.ne.s32.totalorder %s51, %s52
      %p61 = scmp.eq.s32.totalorder %s20, 0
      %p62 = por %p60, %p61
      %p63 = scmp.ne.s32.totalorder %s51, %s52
      %p64 = scmp.eq.s32.totalorder %s21, 1
      %p65 = por %p63, %p64
      %p67 = scmp.ne.s32.totalorder %s52, %s66
      %p68 = scmp.eq.s32.totalorder %s21, 0
      %p69 = por %p67, %p68
      %s71 = sadd.s32 %s70, 1
      %p74 = scmp.eq.s32.totalorder %s15, 1
      %p75 = scmp.ne.s32.totalorder %s70, %s72
      %p76 = scmp.eq.s32.totalorder %s15, 0
      %p77 = por %p75, %p76
      %p78 = scmp.ne.s32.totalorder %s70, %s72
      %p79 = scmp.eq.s32.totalorder %s20, 1
      %p80 = por %p78, %p79
      %p81 = scmp.ne.s32.totalorder %s72, %s73
      %p82 = scmp.eq.s32.totalorder %s20, 0
      %p83 = por %p81, %p82
      %p84 = scmp.ne.s32.totalorder %s72, %s73
      %p85 = scmp.eq.s32.totalorder %s21, 1
      %p86 = por %p84, %p85
      %p88 = scmp.ne.s32.totalorder %s73, %s87
      %p89 = scmp.eq.s32.totalorder %s21, 0
      %p90 = por %p88, %p89
      %s92 = sadd.s32 %s91, 1
      %p95 = scmp.eq.s32.totalorder %s15, 1
      %p96 = scmp.ne.s32.totalorder %s91, %s93
      %p97 = scmp.eq.s32.totalorder %s15, 0
      %p98 = por %p96, %p97
      %p99 = scmp.ne.s32.totalorder %s91, %s93
      %p100 = scmp.eq.s32.totalorder %s20, 1
      %p101 = por %p99, %p100
      %p102 = scmp.ne.s32.totalorder %s93, %s94
      %p103 = scmp.eq.s32.totalorder %s20, 0
      %p104 = por %p102, %p103
      %p105 = scmp.ne.s32.totalorder %s93, %s94
      %p106 = scmp.eq.s32.totalorder %s21, 1
      %p107 = por %p105, %p106
      %p109 = scmp.ne.s32.totalorder %s94, %s108
      %p110 = scmp.eq.s32.totalorder %s21, 0
      %p111 = por %p109, %p110
      %s113 = sadd.s32 %s112, 1
      %p116 = scmp.eq.s32.totalorder %s15, 1
      %p117 = scmp.ne.s32.totalorder %s112, %s114
      %p118 = scmp.eq.s32.totalorder %s15, 0
      %p119 = por %p117, %p118
      %p120 = scmp.ne.s32.totalorder %s112, %s114
      %p121 = scmp.eq.s32.totalorder %s20, 1
      %p122 = por %p120, %p121
      %p123 = scmp.ne.s32.totalorder %s114, %s115
      %p124 = scmp.eq.s32.totalorder %s20, 0
      %p125 = por %p123, %p124
      %p126 = scmp.ne.s32.totalorder %s114, %s115
      %p127 = scmp.eq.s32.totalorder %s21, 1
      %p128 = por %p126, %p127
      %p130 = scmp.ne.s32.totalorder %s115, %s129
      %p131 = scmp.eq.s32.totalorder %s21, 0
      %p132 = por %p130, %p131
      %s134 = sadd.s32 %s133, 1
      %p137 = scmp.eq.s32.totalorder %s15, 1
      %p138 = scmp.ne.s32.totalorder %s133, %s135
      %p139 = scmp.eq.s32.totalorder %s15, 0
      %p140 = por %p138, %p139
      %p141 = scmp.ne.s32.totalorder %s133, %s135
      %p142 = scmp.eq.s32.totalorder %s20, 1
      %p143 = por %p141, %p142
      %p144 = scmp.ne.s32.totalorder %s135, %s136
      %p145 = scmp.eq.s32.totalorder %s20, 0
      %p146 = por %p144, %p145
      %p147 = scmp.ne.s32.totalorder %s135, %s136
      %p148 = scmp.eq.s32.totalorder %s21, 1
      %p149 = por %p147, %p148
      %p151 = scmp.ne.s32.totalorder %s136, %s150
      %p152 = scmp.eq.s32.totalorder %s21, 0
      %p153 = por %p151, %p152
      %s154 = ssub.s32 %s15, %s22
      %p155 = scmp.eq.s32.totalorder %s154, 0
      %s157 = sadd.s32 %s156, 1
      %s158 = scalar_select %p155, %s156, %s157
      %p161 = pneg %p155
      %p162 = scmp.eq.s32.totalorder %s15, 1
      %p163 = por %p161, %p162
      %p164 = scmp.ne.s32.totalorder %s156, %s159
      %p165 = scmp.eq.s32.totalorder %s15, 0
      %p166 = por %p164, %p165
      %p167 = scmp.ne.s32.totalorder %s156, %s159
      %p168 = scmp.eq.s32.totalorder %s20, 1
      %p169 = por %p167, %p168
      %p170 = scmp.ne.s32.totalorder %s159, %s160
      %p171 = scmp.eq.s32.totalorder %s20, 0
      %p172 = por %p170, %p171
      %p173 = scmp.ne.s32.totalorder %s159, %s160
      %p174 = scmp.eq.s32.totalorder %s21, 1
      %p175 = por %p173, %p174
      %p177 = scmp.ne.s32.totalorder %s160, %s176
      %p178 = scmp.eq.s32.totalorder %s21, 0
      %p179 = por %p177, %p178
      %p180 = scmp.le.s32.totalorder 1, %s15
      %p181 = scmp.lt.s32.totalorder %s15, 3
      %p182 = pnand %p180, %p181
      %p183 = pneg %p182
      // Predicated region
      $region9: #{tpu_custom_call.1} parent=5 // pred_check
        _
      $region10: #{tpu_custom_call.1} parent=5 // pred_check_branch
        %185 = sbr.rel (%p182) target = $region12
      $region11: #{tpu_custom_call.1} parent=5 // pred_region
        %s186 = ssub.s32 %s15, 1
        // Predicated region
        $region13: #{tpu_custom_call.1} parent=11 // pred_check
          %p187 = pneg %p62
        $region14: #{tpu_custom_call.1} parent=11 // pred_check_branch
          %189 = sbr.rel (%p187) target = $region16
        $region15: #{tpu_custom_call.1} parent=11 // pred_region
          _
        $region16: #{tpu_custom_call.1} parent=11 // pred_fallthru
          _
        // Predicated region
        $region17: #{tpu_custom_call.1} parent=11 // pred_check
          %p190 = pneg %p83
        $region18: #{tpu_custom_call.1} parent=11 // pred_check_branch
          %192 = sbr.rel (%p190) target = $region20
        $region19: #{tpu_custom_call.1} parent=11 // pred_region
          _
        $region20: #{tpu_custom_call.1} parent=11 // pred_fallthru
          _
        // Predicated region
        $region21: #{tpu_custom_call.1} parent=11 // pred_check
          %p193 = pneg %p104
        $region22: #{tpu_custom_call.1} parent=11 // pred_check_branch
          %195 = sbr.rel (%p193) target = $region24
        $region23: #{tpu_custom_call.1} parent=11 // pred_region
          _
        $region24: #{tpu_custom_call.1} parent=11 // pred_fallthru
          _
        // Predicated region
        $region25: #{tpu_custom_call.1} parent=11 // pred_check
          %p196 = pneg %p125
        $region26: #{tpu_custom_call.1} parent=11 // pred_check_branch
          %198 = sbr.rel (%p196) target = $region28
        $region27: #{tpu_custom_call.1} parent=11 // pred_region
          _
        $region28: #{tpu_custom_call.1} parent=11 // pred_fallthru
          _
        // Predicated region
        $region29: #{tpu_custom_call.1} parent=11 // pred_check
          %p199 = pneg %p146
        $region30: #{tpu_custom_call.1} parent=11 // pred_check_branch
          %201 = sbr.rel (%p199) target = $region32
        $region31: #{tpu_custom_call.1} parent=11 // pred_region
          _
        $region32: #{tpu_custom_call.1} parent=11 // pred_fallthru
          _
      $region12: #{tpu_custom_call.1} parent=5 // pred_fallthru
        _
      %p202 = scmp.lt.s32.totalorder %s15, 2
      // Predicated region
      $region33: #{tpu_custom_call.1} parent=5 // pred_check
        %p203 = pneg %p202
      $region34: #{tpu_custom_call.1} parent=5 // pred_check_branch
        %205 = sbr.rel (%p203) target = $region36
      $region35: #{tpu_custom_call.1} parent=5 // pred_region
        // Predicated region
        $region37: #{tpu_custom_call.1} parent=35 // pred_check
          %p206 = pneg %p35
        $region38: #{tpu_custom_call.1} parent=35 // pred_check_branch
          %208 = sbr.rel (%p206) target = $region40
        $region39: #{tpu_custom_call.1} parent=35 // pred_region
          %p209 = scmp.lt.s32.totalorder %s15, 1
          %s210 = scalar_select %p209, %s15, 1
          %s211 = smul.addr %s210, 10
          %s212 = smul.addr %s211, 8
          %s213 = scalar_lea.vmem %s0, %s212
        $region40: #{tpu_custom_call.1} parent=35 // pred_fallthru
          _
      $region36: #{tpu_custom_call.1} parent=5 // pred_fallthru
        _
      %p214 = scmp.le.s32.totalorder 1, %s15
      %p215 = scmp.lt.s32.totalorder %s15, 3
      %p216 = pnand %p214, %p215
      %p217 = pneg %p216
      // Predicated region
      $region41: #{tpu_custom_call.1} parent=5 // pred_check
        _
      $region42: #{tpu_custom_call.1} parent=5 // pred_check_branch
        %219 = sbr.rel (%p216) target = $region44
      $region43: #{tpu_custom_call.1} parent=5 // pred_region
        %s220 = ssub.s32 %s15, 1
        %p221 = scmp.lt.s32.totalorder %s20, 1
        %s222 = scalar_select %p221, %s20, 1
        %s223 = smul.addr %s222, 10
        %s224 = smul.addr %s223, 8
        %s225 = scalar_lea.vmem %s0, %s224
        %p226 = pneg %p41
        %p227 = pneg %p38
        %p228 = pneg %p62
        %p229 = pneg %p59
        %p230 = pneg %p83
        %p231 = pneg %p80
        %p232 = pneg %p104
        %p233 = pneg %p101
        %p234 = pneg %p125
        %p235 = pneg %p122
        %p236 = pneg %p146
        %p237 = pneg %p143
        %p238 = pneg %p172
        %p239 = pneg %p169
        %s240 = sand.u32 %s159, 1
        %s241 = scalar_lea.sflag [#allocation3], %s240
        %s242 = sand.u32 %s159, 1
        %s243 = smul.addr %s242, 16
        %s244 = scalar_lea.vmem [#allocation2], %s243
        %p245 = scmp.lt.s32.totalorder %s20, 1
        %s246 = scalar_select %p245, %s20, 1
        %s247 = smul.addr %s246, 10
        %s248 = smul.addr %s247, 8
        %s249 = scalar_lea.vmem %s0, %s248
        %v250 = vld [vmem:[%s249] sm:$0xff]
        %v251 = vld [vmem:[%s249 + $0x8] sm:$0xff]
        %v252 = vld [vmem:[%s249 + $0x10] sm:$0xff]
        %v253 = vld [vmem:[%s249 + $0x18] sm:$0xff]
        %v254 = vld [vmem:[%s249 + $0x20] sm:$0xff]
        %v255 = vld [vmem:[%s249 + $0x28] sm:$0xff]
        %v256 = vld [vmem:[%s249 + $0x30] sm:$0xff]
        %v257 = vld [vmem:[%s249 + $0x38] sm:$0xff]
        %v258 = vld [vmem:[%s249 + $0x40] sm:$0xf]
        %v259 = vld [vmem:[%s249 + $0x48] sm:$0xf]
        %v260 = vld [vmem:[%s1] sm:$0xff]
        %v261 = vld [vmem:[%s2] sm:$0xff]
        %263 = vset.pattern.permute.xlu0 0
        %264 = vperm.xlu0 %263, %v261
        %v265 = vpop.permute.xlu0 %264
        %vm267 = vcmask 293888
        %v269 = vsel %vm267, %v260, 0
        %vm271 = vcmask 1043456
        %v273 = vsel %vm271, %v258, 0
        %v276 = vsel %vm271, %v259, 0
        %278 = vmatprep.subr.mxu0 0.0
        %279 = vmatpush1.msra.mxu0 0.0
        %280 = vmatprep.subr.mxu0 0.0
        %281 = vmatpush1.msra.mxu0 0.0
        %282 = vmatprep.subr.mxu0 0.0
        %283 = vmatpush1.msra.mxu0 0.0
        %284 = vmatprep.subr.mxu0 0.0
        %285 = vmatpush1.msra.mxu0 0.0
        %286 = vmatprep.subr.mxu0 0.0
        %287 = vmatpush1.msra.mxu0 0.0
        %288 = vmatprep.subr.mxu0 0.0
        %289 = vmatpush1.msra.mxu0 0.0
        %290 = vmatprep.subr.mxu0 0.0
        %291 = vmatpush1.msra.mxu0 0.0
        %292 = vmatprep.subr.mxu0 0.0
        %293 = vmatpush1.msra.mxu0 0.0
        %294 = vmatprep.subr.mxu0 0.0
        %295 = vmatpush1.msra.mxu0 0.0
        %296 = vmatprep.subr.mxu0 0.0
        %297 = vmatpush1.msra.mxu0 0.0
        %298 = vmatprep.subr.mxu0 0.0
        %299 = vmatpush1.msra.mxu0 0.0
        %300 = vmatprep.subr.mxu0 %v276
        %301 = vmatpush1.msra.mxu0 %v273
        %302 = vmatprep.subr.mxu0 %v257
        %303 = vmatpush1.msra.mxu0 %v256
        %304 = vmatprep.subr.mxu0 %v255
        %305 = vmatpush1.msra.mxu0 %v254
        %306 = vmatprep.subr.mxu0 %v253
        %307 = vmatpush1.msra.mxu0 %v252
        %308 = vmatprep.subr.mxu0 %v251
        %309 = vmatpush1.msra.mxu0 %v250
        %310 = vmatprep.subr.mxu0 0.0
        %311 = vmatpush2.msra.mxu0 0.0
        %312 = vmatprep.subr.mxu0 0.0
        %313 = vmatpush2.msra.mxu0 0.0
        %314 = vmatprep.subr.mxu0 0.0
        %315 = vmatpush2.msra.mxu0 0.0
        %316 = vmatprep.subr.mxu0 0.0
        %317 = vmatpush2.msra.mxu0 0.0
        %318 = vmatprep.subr.mxu0 0.0
        %319 = vmatpush2.msra.mxu0 0.0
        %320 = vmatprep.subr.mxu0 0.0
        %321 = vmatpush2.msra.mxu0 0.0
        %322 = vmatprep.subr.mxu0 0.0
        %323 = vmatpush2.msra.mxu0 0.0
        %324 = vmatprep.subr.mxu0 0.0
        %325 = vmatpush2.msra.mxu0 0.0
        %326 = vmatprep.subr.mxu0 0.0
        %327 = vmatpush2.msra.mxu0 0.0
        %328 = vmatprep.subr.mxu0 0.0
        %329 = vmatpush2.msra.mxu0 0.0
        %330 = vmatprep.subr.mxu0 0.0
        %331 = vmatpush2.msra.mxu0 0.0
        %332 = vmatprep.subr.mxu0 0.0
        %333 = vmatpush2.msra.mxu0 0.0
        %334 = vmatprep.subr.mxu0 0.0
        %335 = vmatpush2.msra.mxu0 0.0
        %336 = vmatprep.subr.mxu0 0.0
        %337 = vmatpush2.msra.mxu0 0.0
        %338 = vmatprep.subr.mxu0 0.0
        %339 = vmatpush2.msra.mxu0 0.0
        %340 = vmatprep.subr.mxu0 0.0
        %341 = vmatpush2.msra.mxu0 0.0
        %342 = vmatprep.mubr.f32.mxu0 0.0
        %343 = vmatmul.mubr.f32.gmra.mxu0 %v269
        %v344 = vpop.f32.mrf.mxu0
        %v345 = vadd.f32 %v265, %v344
        %v346 = vpop.f32.mrf.mxu0
        %v347 = vadd.f32 %v265, %v346
        %348 = vdwg.mxu0
        %v349 = vld [vmem:[%s5] sm:$0xff]
        %vm350 = vcmask 64512
        %v352 = vsel %vm350, %v349, 0
        %354 = vmatprep.subr.mxu0 0.0
        %355 = vmatpush1.msra.mxu0 0.0
        %356 = vmatprep.subr.mxu0 0.0
        %357 = vmatpush1.msra.mxu0 0.0
        %358 = vmatprep.subr.mxu0 0.0
        %359 = vmatpush1.msra.mxu0 0.0
        %360 = vmatprep.subr.mxu0 0.0
        %361 = vmatpush1.msra.mxu0 0.0
        %362 = vmatprep.subr.mxu0 0.0
        %363 = vmatpush1.msra.mxu0 0.0
        %364 = vmatprep.subr.mxu0 0.0
        %365 = vmatpush1.msra.mxu0 0.0
        %366 = vmatprep.subr.mxu0 0.0
        %367 = vmatpush1.msra.mxu0 0.0
        %368 = vmatprep.subr.mxu0 0.0
        %369 = vmatpush1.msra.mxu0 0.0
        %370 = vmatprep.subr.mxu0 0.0
        %371 = vmatpush1.msra.mxu0 0.0
        %372 = vmatprep.subr.mxu0 0.0
        %373 = vmatpush1.msra.mxu0 0.0
        %374 = vmatprep.subr.mxu0 0.0
        %375 = vmatpush1.msra.mxu0 0.0
        %376 = vmatprep.subr.mxu0 0.0
        %377 = vmatpush1.msra.mxu0 0.0
        %378 = vmatprep.subr.mxu0 0.0
        %379 = vmatpush1.msra.mxu0 0.0
        %380 = vmatprep.subr.mxu0 0.0
        %381 = vmatpush1.msra.mxu0 0.0
        %382 = vmatprep.subr.mxu0 0.0
        %383 = vmatpush1.msra.mxu0 0.0
        %384 = vmatprep.subr.mxu0 %v347
        %385 = vmatpush1.msra.mxu0 %v345
        %386 = vmatprep.subr.mxu0 0.0
        %387 = vmatpush2.msra.mxu0 0.0
        %388 = vmatprep.subr.mxu0 0.0
        %389 = vmatpush2.msra.mxu0 0.0
        %390 = vmatprep.subr.mxu0 0.0
        %391 = vmatpush2.msra.mxu0 0.0
        %392 = vmatprep.subr.mxu0 0.0
        %393 = vmatpush2.msra.mxu0 0.0
        %394 = vmatprep.subr.mxu0 0.0
        %395 = vmatpush2.msra.mxu0 0.0
        %396 = vmatprep.subr.mxu0 0.0
        %397 = vmatpush2.msra.mxu0 0.0
        %398 = vmatprep.subr.mxu0 0.0
        %399 = vmatpush2.msra.mxu0 0.0
        %400 = vmatprep.subr.mxu0 0.0
        %401 = vmatpush2.msra.mxu0 0.0
        %402 = vmatprep.subr.mxu0 0.0
        %403 = vmatpush2.msra.mxu0 0.0
        %404 = vmatprep.subr.mxu0 0.0
        %405 = vmatpush2.msra.mxu0 0.0
        %406 = vmatprep.subr.mxu0 0.0
        %407 = vmatpush2.msra.mxu0 0.0
        %408 = vmatprep.subr.mxu0 0.0
        %409 = vmatpush2.msra.mxu0 0.0
        %410 = vmatprep.subr.mxu0 0.0
        %411 = vmatpush2.msra.mxu0 0.0
        %412 = vmatprep.subr.mxu0 0.0
        %413 = vmatpush2.msra.mxu0 0.0
        %414 = vmatprep.subr.mxu0 0.0
        %415 = vmatpush2.msra.mxu0 0.0
        %416 = vmatprep.subr.mxu0 0.0
        %417 = vmatpush2.msra.mxu0 0.0
        %418 = vmatprep.mubr.f32.mxu0 0.0
        %419 = vmatmul.mubr.f32.gmra.mxu0 %v352
        %v420 = vpop.f32.mrf.mxu0
        %v421 = vadd.f32 0.0, %v420
        %v422 = vpop.f32.mrf.mxu0
        %v423 = vadd.f32 0.0, %v422
        %424 = vdwg.mxu0
        %v425 = vadd.f32 %v421, %v423
        %426 = vadd.xlane.f32.xlu0 %v425
        %v427 = vpop.xlane.xlu0 %426
        %v428 = vmul.f32 %v427, 0.001953125
        %v429 = vsub.f32 %v345, %v428
        %v430 = vsub.f32 %v347, %v428
        %v431 = vmul.f32 %v429, %v429
        %v432 = vmul.f32 %v430, %v430
        %433 = vmatprep.subr.mxu0 0.0
        %434 = vmatpush1.msra.mxu0 0.0
        %435 = vmatprep.subr.mxu0 0.0
        %436 = vmatpush1.msra.mxu0 0.0
        %437 = vmatprep.subr.mxu0 0.0
        %438 = vmatpush1.msra.mxu0 0.0
        %439 = vmatprep.subr.mxu0 0.0
        %440 = vmatpush1.msra.mxu0 0.0
        %441 = vmatprep.subr.mxu0 0.0
        %442 = vmatpush1.msra.mxu0 0.0
        %443 = vmatprep.subr.mxu0 0.0
        %444 = vmatpush1.msra.mxu0 0.0
        %445 = vmatprep.subr.mxu0 0.0
        %446 = vmatpush1.msra.mxu0 0.0
        %447 = vmatprep.subr.mxu0 0.0
        %448 = vmatpush1.msra.mxu0 0.0
        %449 = vmatprep.subr.mxu0 0.0
        %450 = vmatpush1.msra.mxu0 0.0
        %451 = vmatprep.subr.mxu0 0.0
        %452 = vmatpush1.msra.mxu0 0.0
        %453 = vmatprep.subr.mxu0 0.0
        %454 = vmatpush1.msra.mxu0 0.0
        %455 = vmatprep.subr.mxu0 0.0
        %456 = vmatpush1.msra.mxu0 0.0
        %457 = vmatprep.subr.mxu0 0.0
        %458 = vmatpush1.msra.mxu0 0.0
        %459 = vmatprep.subr.mxu0 0.0
        %460 = vmatpush1.msra.mxu0 0.0
        %461 = vmatprep.subr.mxu0 0.0
        %462 = vmatpush1.msra.mxu0 0.0
        %463 = vmatprep.subr.mxu0 %v432
        %464 = vmatpush1.msra.mxu0 %v431
        %465 = vmatprep.subr.mxu0 0.0
        %466 = vmatpush2.msra.mxu0 0.0
        %467 = vmatprep.subr.mxu0 0.0
        %468 = vmatpush2.msra.mxu0 0.0
        %469 = vmatprep.subr.mxu0 0.0
        %470 = vmatpush2.msra.mxu0 0.0
        %471 = vmatprep.subr.mxu0 0.0
        %472 = vmatpush2.msra.mxu0 0.0
        %473 = vmatprep.subr.mxu0 0.0
        %474 = vmatpush2.msra.mxu0 0.0
        %475 = vmatprep.subr.mxu0 0.0
        %476 = vmatpush2.msra.mxu0 0.0
        %477 = vmatprep.subr.mxu0 0.0
        %478 = vmatpush2.msra.mxu0 0.0
        %479 = vmatprep.subr.mxu0 0.0
        %480 = vmatpush2.msra.mxu0 0.0
        %481 = vmatprep.subr.mxu0 0.0
        %482 = vmatpush2.msra.mxu0 0.0
        %483 = vmatprep.subr.mxu0 0.0
        %484 = vmatpush2.msra.mxu0 0.0
        %485 = vmatprep.subr.mxu0 0.0
        %486 = vmatpush2.msra.mxu0 0.0
        %487 = vmatprep.subr.mxu0 0.0
        %488 = vmatpush2.msra.mxu0 0.0
        %489 = vmatprep.subr.mxu0 0.0
        %490 = vmatpush2.msra.mxu0 0.0
        %491 = vmatprep.subr.mxu0 0.0
        %492 = vmatpush2.msra.mxu0 0.0
        %493 = vmatprep.subr.mxu0 0.0
        %494 = vmatpush2.msra.mxu0 0.0
        %495 = vmatprep.subr.mxu0 0.0
        %496 = vmatpush2.msra.mxu0 0.0
        %497 = vmatprep.mubr.f32.mxu0 0.0
        %498 = vmatmul.mubr.f32.gmra.mxu0 %v352
        %v499 = vpop.f32.mrf.mxu0
        %v500 = vadd.f32 0.0, %v499
        %v501 = vpop.f32.mrf.mxu0
        %v502 = vadd.f32 0.0, %v501
        %503 = vdwg.mxu0
        %v504 = vadd.f32 %v500, %v502
        %505 = vadd.xlane.f32.xlu0 %v504
        %v506 = vpop.xlane.xlu0 %505
        %v507 = vmul.f32 %v506, 0.001953125
        %v508 = vadd.f32 %v507, 1e-05
        %v509 = vrsqrt.pop %v508
        %v510 = vmul.f32 %v429, %v509
        %v511 = vmul.f32 %v430, %v509
        %v512 = vld [vmem:[%s3] sm:$0xff]
        %514 = vset.pattern.permute.xlu0 0
        %515 = vperm.xlu0 %514, %v512
        %v516 = vpop.permute.xlu0 %515
        %v518 = vmul.f32 %v510, %v516
        %v519 = vmul.f32 %v511, %v516
        %v520 = vld [vmem:[%s4] sm:$0xff]
        %522 = vset.pattern.permute.xlu0 0
        %523 = vperm.xlu0 %522, %v520
        %v524 = vpop.permute.xlu0 %523
        %v526 = vadd.f32 %v518, %v524
        %v527 = vadd.f32 %v519, %v524
        %v528 = vsub.f32 0.0, %v526
        %v529 = vsub.f32 0.0, %v527
        %v530 = vmul.f32 %v528, 1.442695
        %v531 = vpow.pop %v530
        %v532 = vmul.f32 %v529, 1.442695
        %v533 = vpow.pop %v532
        %v534 = vadd.f32 %v531, 1.0
        %v535 = vadd.f32 %v533, 1.0
        %v536 = vrcp.pop %v534
        %v537 = vmul.f32 1.0, %v536
        %v538 = vrcp.pop %v535
        %v539 = vmul.f32 1.0, %v538
        %v540 = vmul.f32 %v526, %v537
        %v541 = vmul.f32 %v527, %v539
        %542 = vst [vmem:[%s244] sm:$0xff] %v540
        %543 = vst [vmem:[%s244 + $0x8] sm:$0xff] %v541
        %s544 = sand.u32 %s159, 1
        %s545 = scalar_lea.sflag [#allocation3], %s544
        %s546 = sand.u32 %s159, 1
        %s547 = smul.addr %s546, 16
        %s548 = scalar_lea.vmem [#allocation2], %s547
        // Predicated region
        $region45: #{tpu_custom_call.1} parent=43 // pred_check
          %p549 = pneg %p169
        $region46: #{tpu_custom_call.1} parent=43 // pred_check_branch
          %551 = sbr.rel (%p549) target = $region48
        $region47: #{tpu_custom_call.1} parent=43 // pred_region
          %s553 = ssub.s32 256, 256
          %554 = vsyncadd %s545, %s553
          %s555 = smul.addr %s20, 2
          %s556 = smul.addr %s555, 128
          %s557 = scalar_lea.hbm %s6, %s556
          %s559 = sshll.u32 %s548, 4
          %s560 = int_to_ptr.vmem [resolvable:$true] %s559
          %562 = dma.vmem_to_hbm [thread:$0]  %s560, 256, %s557, %s545
        $region48: #{tpu_custom_call.1} parent=43 // pred_fallthru
          _
      $region44: #{tpu_custom_call.1} parent=5 // pred_fallthru
        _
      %p563 = scmp.le.s32.totalorder 2, %s15
      // Predicated region
      $region49: #{tpu_custom_call.1} parent=5 // pred_check
        %p564 = pneg %p563
      $region50: #{tpu_custom_call.1} parent=5 // pred_check_branch
        %566 = sbr.rel (%p564) target = $region52
      $region51: #{tpu_custom_call.1} parent=5 // pred_region
        %s567 = ssub.s32 %s15, 2
        // Predicated region
        $region53: #{tpu_custom_call.1} parent=51 // pred_check
          %p568 = pneg %p175
        $region54: #{tpu_custom_call.1} parent=51 // pred_check_branch
          %570 = sbr.rel (%p568) target = $region56
        $region55: #{tpu_custom_call.1} parent=51 // pred_region
          %s571 = sand.u32 %s160, 1
          %s572 = scalar_lea.sflag [#allocation3], %s571
          %s573 = sand.u32 %s160, 1
          %s574 = smul.addr %s573, 16
          %s575 = scalar_lea.vmem [#allocation2], %s574
          %576 = dma.done %s572, 256
        $region56: #{tpu_custom_call.1} parent=51 // pred_fallthru
          _
      $region52: #{tpu_custom_call.1} parent=5 // pred_fallthru
        _
    $region6: #{tpu_custom_call.1} parent=1 // loop_footer
      %s19 = sadd.s32 1, %s15
    $region7: #{tpu_custom_call.1} parent=1 // loop_footer_branch
      %14 = sbr.rel target = $region3
    $region8: #{tpu_custom_call.1} parent=1 // loop_exit
      _
    %577 = vsyncpa [#allocation3], 1
    %s578 = scalar_lea.sflag [#allocation3], 1
    %579 = vsyncpa %s578, 1

</llo_original>
